<compile_context>
chip_gen: v6e
topology: v6e:2x2x1
jax: 0.10.0
libtpu: 0.0.40
codegen_flags: <defaults>
</compile_context>

<pallas_src>
import functools

import jax
import jax.numpy as jnp
from jax.experimental import pallas as pl
from jax.experimental.pallas import tpu as pltpu


_LANE = 128


def _round_up(x, m):
    return ((x + m - 1) // m) * m


def _vmem_limit_bytes():
    """Generation-aware scoped-VMEM budget (~3/4 capacity, capped at 100 MiB)."""
    try:
        cap = pltpu.get_tpu_info().vmem_capacity_bytes
        return int(min(cap * 3 // 4, 100 * 1024 * 1024))
    except Exception:
        # Safe on every generation (v7x has only 64 MiB of VMEM per TC).
        return 48 * 1024 * 1024


def _fc_kernel(x_ref, w_ref, b_ref, *rest, nl):
    """One (tm, tn) tile of nl(x @ w + b).

    x_ref: (tm, tk) compute dtype      w_ref: (tk, tn) compute dtype (pre-transposed)
    b_ref: (1, tn)  float32            a_ref: (1, tn) float32 (only when nl=='prelu')
    o_ref: (tm, tn) float32 -- doubles as the accumulator (its index_map
           ignores k, so the block stays resident in VMEM across the K axis).
    Grid: (M//tm, N//tn, K//tk), K innermost ("arbitrary").
    """
    if nl == "prelu":
        a_ref, o_ref = rest
    else:
        (o_ref,) = rest

    k = pl.program_id(2)
    part = jnp.dot(x_ref[...], w_ref[...], preferred_element_type=jnp.float32)

    @pl.when(k == 0)
    def _():
        o_ref[...] = part            # first write: no zero-init store needed

    @pl.when(k > 0)
    def _():
        o_ref[...] += part           # f32 accumulate in the resident output tile

    @pl.when(k == pl.num_programs(2) - 1)
    def _():
        acc = o_ref[...] + b_ref[...]          # bias broadcast over rows
        if nl == "relu":
            acc = jnp.maximum(acc, 0.0)
        elif nl == "prelu":
            acc = jnp.where(acc > 0.0, acc, a_ref[...] * acc)
        # nl == "none": pure linear
        o_ref[...] = acc


class FCPallas:
    """FC module: out = NL(x @ weight.T + bias).

    Weight preparation (pad -> transpose to (K, N) -> cast to compute dtype)
    happens ONCE here and is cached, so the per-call hot path only pads/casts
    the activation.
    """

    def __init__(self, weight, bias, nl="relu", prelu_alpha=0.25,
                 compute_dtype=jnp.bfloat16, tn=1024, tk=1024):
        assert nl in ("relu", "prelu", "none")
        N, K = weight.shape
        assert bias.shape == (N,)
        self.nl = nl
        self.compute_dtype = compute_dtype
        self.N, self.K = N, K

        tn = _round_up(min(tn, _round_up(N, _LANE)), _LANE)
        tk = _round_up(min(tk, _round_up(K, _LANE)), _LANE)
        Np, Kp = _round_up(N, tn), _round_up(K, tk)
        # Megacore (v7x): prefer >= 2 output-column blocks when N allows it,
        # so a single-(i,j) problem doesn't leave one TensorCore idle.
        if Np // tn < 2 and Np >= 2 * _LANE:
            tn = max(_LANE, _round_up(Np // 2, _LANE))
            Np = _round_up(N, tn)
        self.tn, self.tk, self.Np, self.Kp = tn, tk, Np, Kp

        # --- one-time, cached weight/bias prep (hoisted out of the hot path) ---
        w_pad = weight if (Np == N and Kp == K) else jnp.pad(
            weight, ((0, Np - N), (0, Kp - K)))
        self.wT = jnp.asarray(w_pad.T, dtype=compute_dtype)          # (Kp, Np)
        self.b = jnp.pad(jnp.asarray(bias, jnp.float32),
                         (0, Np - N)).reshape(1, Np)
        if nl == "prelu":
            alpha = jnp.broadcast_to(
                jnp.asarray(prelu_alpha, jnp.float32).reshape(-1), (N,))
            self.a = jnp.pad(alpha, (0, Np - N)).reshape(1, Np)
        else:
            self.a = None

    def __call__(self, x, tm=512):
        M, K = x.shape
        assert K == self.K
        # bf16 minimum tile is (16, 128); f32 is (8, 128).
        sub = 16 if self.compute_dtype == jnp.bfloat16 else 8
        tm = _round_up(min(tm, _round_up(M, sub)), sub)
        Mp = _round_up(M, tm)
        # Megacore: if everything collapsed to one (i, j) block, try splitting rows.
        if (Mp // tm) * (self.Np // self.tn) < 2 and Mp >= 2 * sub and tm > sub:
            tm = max(sub, _round_up(tm // 2, sub))
            Mp = _round_up(M, tm)

        xp = x
        if Mp != M or self.Kp != K:
            # Zero-padding K is required for accumulation correctness.
            xp = jnp.pad(x, ((0, Mp - M), (0, self.Kp - K)))
        xp = xp.astype(self.compute_dtype)

        grid = (Mp // tm, self.Np // self.tn, self.Kp // self.tk)
        kernel = functools.partial(_fc_kernel, nl=self.nl)

        in_specs = [
            pl.BlockSpec((tm, self.tk), lambda i, j, k: (i, k)),        # x
            pl.BlockSpec((self.tk, self.tn), lambda i, j, k: (k, j)),   # w.T (K,N)
            pl.BlockSpec((1, self.tn), lambda i, j, k: (0, j)),         # bias
        ]
        args = [xp, self.wT, self.b]
        if self.nl == "prelu":
            in_specs.append(pl.BlockSpec((1, self.tn), lambda i, j, k: (0, j)))
            args.append(self.a)

        out = pl.pallas_call(
            kernel,
            out_shape=jax.ShapeDtypeStruct((Mp, self.Np), jnp.float32),
            grid_spec=pltpu.PrefetchScalarGridSpec(
                num_scalar_prefetch=0,
                grid=grid,
                in_specs=in_specs,
                out_specs=pl.BlockSpec((tm, self.tn), lambda i, j, k: (i, j)),
            ),
            compiler_params=pltpu.CompilerParams(
                dimension_semantics=("parallel", "parallel", "arbitrary"),
                vmem_limit_bytes=_vmem_limit_bytes(),
            ),
        )(*args)

        if Mp != M or self.Np != self.N:
            out = out[:M, :self.N]
        return out


def fc_forward(x, weight, bias, nl="relu", prelu_alpha=0.25,
               compute_dtype=jnp.bfloat16):
    """One-shot convenience wrapper (prefer FCPallas to amortize weight prep)."""
    return FCPallas(weight, bias, nl=nl, prelu_alpha=prelu_alpha,
                    compute_dtype=compute_dtype)(x)


if __name__ == "__main__":
    key = jax.random.PRNGKey(0)
    k_x, k_w, k_b = jax.random.split(key, 3)

    batch = 8
    in_features = 32
    out_features = 64

    x = jax.random.normal(k_x, (batch, in_features), dtype=jnp.float32)
    # Deterministic "nn.Linear"-style init (uniform in +-1/sqrt(in_features)).
    bound = 1.0 / (in_features ** 0.5)
    weight = jax.random.uniform(
        k_w, (out_features, in_features),
        minval=-bound, maxval=bound, dtype=jnp.float32)
    bias = jax.random.uniform(
        k_b, (out_features,), minval=-bound, maxval=bound, dtype=jnp.float32)

    lin = x @ weight.T + bias
    # Reference for the bf16 compute path (inputs rounded to bf16, f32 accum).
    lin_bf16 = (x.astype(jnp.bfloat16).astype(jnp.float32)
                @ weight.astype(jnp.bfloat16).astype(jnp.float32).T) + bias

    # --- f32 compute path: exact structural check ---
    fc_f32 = FCPallas(weight, bias, nl="relu", compute_dtype=jnp.float32)
    out_f32 = jax.block_until_ready(fc_f32(x))
    assert out_f32.shape == (batch, out_features)
    assert jnp.allclose(out_f32, jnp.maximum(lin, 0.0), atol=1e-5, rtol=1e-5)

    # --- bf16 compute path (module default NL='relu') ---
    fc_relu = FCPallas(weight, bias, nl="relu")          # cached weight prep
    out = jax.block_until_ready(fc_relu(x))
    assert out.shape == (batch, out_features)
    assert jnp.allclose(out, jnp.maximum(lin_bf16, 0.0), atol=1e-3, rtol=1e-3)
    assert jnp.allclose(out, jnp.maximum(lin, 0.0), atol=3e-2, rtol=3e-2)

    # --- NL='prelu' (PyTorch PReLU default slope 0.25) ---
    fc_prelu = FCPallas(weight, bias, nl="prelu", prelu_alpha=0.25)
    out_p = jax.block_until_ready(fc_prelu(x))
    ref_p = jnp.where(lin_bf16 > 0, lin_bf16, 0.25 * lin_bf16)
    assert jnp.allclose(out_p, ref_p, atol=1e-3, rtol=1e-3)

    # --- NL=anything else -> pure linear ---
    out_n = jax.block_until_ready(fc_forward(x, weight, bias, nl="none"))
    assert jnp.allclose(out_n, lin_bf16, atol=1e-3, rtol=1e-3)

    print("KERNEL_OK")
</pallas_src>

<mosaic_0001>
module attributes {stable_mosaic.version = 11 : i64} {
  func.func @_fc_kernel(%arg0: i32, %arg1: i32, %arg2: i32, %arg3: memref<8x128xf32, #tpu.memory_space<vmem>>, %arg4: memref<128x128xf32, #tpu.memory_space<vmem>>, %arg5: memref<1x128xf32, #tpu.memory_space<vmem>>, %arg6: memref<8x128xf32, #tpu.memory_space<vmem>>) attributes {dimension_semantics = [#tpu.dimension_semantics<parallel>, #tpu.dimension_semantics<parallel>, #tpu.dimension_semantics<arbitrary>], iteration_bounds = array<i64: 1, 1, 1>, scalar_prefetch = 0 : i64, scratch_operands = 0 : i64, tpu.core_type = #tpu.core_type<tc>, window_params = [{transform_indices = @transform_0, window_bounds = array<i64: 8, 128>}, {transform_indices = @transform_1, window_bounds = array<i64: 128, 128>}, {transform_indices = @transform_2, window_bounds = array<i64: 1, 128>}, {transform_indices = @transform_3, window_bounds = array<i64: 8, 128>}]} {
    %c0 = arith.constant 0 : index
    %c0_0 = arith.constant 0 : index
    %0 = vector.load %arg3[%c0, %c0_0] : memref<8x128xf32, #tpu.memory_space<vmem>>, vector<8x128xf32>
    %c0_1 = arith.constant 0 : index
    %c0_2 = arith.constant 0 : index
    %1 = vector.load %arg4[%c0_1, %c0_2] : memref<128x128xf32, #tpu.memory_space<vmem>>, vector<128x128xf32>
    %cst = arith.constant dense<0.000000e+00> : vector<8x128xf32>
    %2 = tpu.matmul %0, %1, %cst {dimension_numbers = #tpu.dot_dimension_numbers<[1], [0], [0], [1], [0, 0, 1, 1], [], []>} : vector<8x128xf32>, vector<128x128xf32>, vector<8x128xf32> -> vector<8x128xf32>
    %c0_i32 = arith.constant 0 : i32
    %3 = arith.cmpi eq, %arg2, %c0_i32 : i32
    %4 = arith.extui %3 : i1 to i32
    %c0_i32_3 = arith.constant 0 : i32
    %5 = arith.cmpi ne, %4, %c0_i32_3 : i32
    scf.if %5 {
      %c0_8 = arith.constant 0 : index
      %c0_9 = arith.constant 0 : index
      %12 = vector.load %arg6[%c0_8, %c0_9] : memref<8x128xf32, #tpu.memory_space<vmem>>, vector<8x128xf32>
      tpu.vector_store %arg6[%c0_8, %c0_9], %2 {strides = array<i32>} : memref<8x128xf32, #tpu.memory_space<vmem>>, vector<8x128xf32>,
    } else {
    }
    %c0_i32_4 = arith.constant 0 : i32
    %6 = arith.cmpi sgt, %arg2, %c0_i32_4 : i32
    %7 = arith.extui %6 : i1 to i32
    %c0_i32_5 = arith.constant 0 : i32
    %8 = arith.cmpi ne, %7, %c0_i32_5 : i32
    scf.if %8 {
      %c0_8 = arith.constant 0 : index
      %c0_9 = arith.constant 0 : index
      %12 = vector.load %arg6[%c0_8, %c0_9] : memref<8x128xf32, #tpu.memory_space<vmem>>, vector<8x128xf32>
      %13 = arith.addf %12, %2 : vector<8x128xf32>
      %c0_10 = arith.constant 0 : index
      %c0_11 = arith.constant 0 : index
      %14 = vector.load %arg6[%c0_10, %c0_11] : memref<8x128xf32, #tpu.memory_space<vmem>>, vector<8x128xf32>
      tpu.vector_store %arg6[%c0_10, %c0_11], %13 {strides = array<i32>} : memref<8x128xf32, #tpu.memory_space<vmem>>, vector<8x128xf32>,
    } else {
    }
    %c0_i32_6 = arith.constant 0 : i32
    %9 = arith.cmpi eq, %arg2, %c0_i32_6 : i32
    %10 = arith.extui %9 : i1 to i32
    %c0_i32_7 = arith.constant 0 : i32
    %11 = arith.cmpi ne, %10, %c0_i32_7 : i32
    scf.if %11 {
      %c0_8 = arith.constant 0 : index
      %c0_9 = arith.constant 0 : index
      %12 = vector.load %arg6[%c0_8, %c0_9] : memref<8x128xf32, #tpu.memory_space<vmem>>, vector<8x128xf32>
      %c0_10 = arith.constant 0 : index
      %c0_11 = arith.constant 0 : index
      %13 = vector.load %arg5[%c0_10, %c0_11] : memref<1x128xf32, #tpu.memory_space<vmem>>, vector<1x128xf32>
      %14 = vector.broadcast %13 : vector<1x128xf32> to vector<8x128xf32>
      %15 = arith.addf %12, %14 : vector<8x128xf32>
      %cst_12 = arith.constant 0.000000e+00 : f32
      %16 = vector.broadcast %cst_12 : f32 to vector<8x128xf32>
      %17 = arith.maximumf %15, %16 : vector<8x128xf32>
      %c0_13 = arith.constant 0 : index
      %c0_14 = arith.constant 0 : index
      %18 = vector.load %arg6[%c0_13, %c0_14] : memref<8x128xf32, #tpu.memory_space<vmem>>, vector<8x128xf32>
      tpu.vector_store %arg6[%c0_13, %c0_14], %17 {strides = array<i32>} : memref<8x128xf32, #tpu.memory_space<vmem>>, vector<8x128xf32>,
    } else {
    }
    return
  }
  func.func @transform_0(%arg0: i32, %arg1: i32, %arg2: i32) -> (i32, i32) {
    %c0_i32 = arith.constant 0 : i32
    return %arg0, %arg2 : i32, i32
  }
  func.func @transform_1(%arg0: i32, %arg1: i32, %arg2: i32) -> (i32, i32) {
    %c0_i32 = arith.constant 0 : i32
    return %arg2, %arg1 : i32, i32
  }
  func.func @transform_2(%arg0: i32, %arg1: i32, %arg2: i32) -> (i32, i32) {
    %c0_i32 = arith.constant 0 : i32
    %c0_i32_0 = arith.constant 0 : i32
    return %c0_i32, %arg1 : i32, i32
  }
  func.func @transform_3(%arg0: i32, %arg1: i32, %arg2: i32) -> (i32, i32) {
    %c0_i32 = arith.constant 0 : i32
    return %arg0, %arg1 : i32, i32
  }
}

</mosaic_0001>

<llo_original>
// kernel: tpu_custom_call.1
$region0: #{tpu_custom_call.1}
  #allocation0 [shape = 'u32[]', space=smem, size = 0x4, offset = 0x4, fixed_abs, tag = 'smem constant byte address 0x4 - core index']
  #allocation1 [shape = 'u32[144,128]{1,0:T(1,128)}', space=vmem, size = 0x12000, scoped, tag = 'internal scratch']
  %s0 = inlined_call_operand.hbm [shape: f32[8,128], index: 0, kind: input, shape index: {}]
  %s1 = inlined_call_operand.hbm [shape: f32[128,128], index: 1, kind: input, shape index: {}]
  %s2 = inlined_call_operand.vmem [shape: f32[1,128], index: 2, kind: input, shape index: {}]
  %s3 = inlined_call_operand.hbm [shape: f32[8,128], index: 3, kind: output, shape index: {}]
  %s4 = sld [smem:[#allocation0]]
  $region42: #{tpu_custom_call.1} parent=0
    _
  %s6 = ssub.s32 1, %s4
  %s7 = scalar_select 0, %s6, %s4
  $region1: #{tpu_custom_call.1} parent=0
    #allocation2 [shape = 'u8[4096]{0}', space=vmem, size = 0x1000, scoped, tag = 'input window, operand 0, single buffered']
    #allocation3 [shape = 's32[1]{0}', space=sflag, size = 0x4, scoped, tag = 'scoped memory for tpu_custom_call.1']
    #allocation4 [shape = 's32[1]{0}', space=sflag, size = 0x4, scoped, tag = 'scoped memory for tpu_custom_call.1']
    #allocation5 [shape = 'u8[65536]{0}', space=vmem, size = 0x10000, scoped, tag = 'input window, operand 1, single buffered']
    #allocation6 [shape = 's32[1]{0}', space=sflag, size = 0x4, scoped, tag = 'scoped memory for tpu_custom_call.1']
    #allocation7 [shape = 'u8[4096]{0}', space=vmem, size = 0x1000, scoped, tag = 'output window, operand 0, single buffered']
    %8 = vsyncpa [#allocation3], 0
    %9 = vsyncpa [#allocation6], 0
    %10 = vsyncpa [#allocation4], 0
    // Predicated region
    $region2: #{tpu_custom_call.1} parent=1 // pred_check
      _
    $region3: #{tpu_custom_call.1} parent=1 // pred_check_branch
      %12 = sbr.rel (0) target = $region5
    $region4: #{tpu_custom_call.1} parent=1 // pred_region
      %s14 = ssub.s32 128, 128
      %15 = vsyncadd [#allocation3], %s14
      %s17 = sshll.u32 [#allocation2], 4
      %s18 = int_to_ptr.vmem [resolvable:$true] %s17
      %20 = dma.hbm_to_vmem [thread:$0]  %s0, 128, %s18, [#allocation3]
    $region5: #{tpu_custom_call.1} parent=1 // pred_fallthru
      _
    // Predicated region
    $region6: #{tpu_custom_call.1} parent=1 // pred_check
      _
    $region7: #{tpu_custom_call.1} parent=1 // pred_check_branch
      %22 = sbr.rel (0) target = $region9
    $region8: #{tpu_custom_call.1} parent=1 // pred_region
      %s24 = ssub.s32 2048, 2048
      %25 = vsyncadd [#allocation6], %s24
      %s26 = sshll.u32 [#allocation5], 4
      %s27 = int_to_ptr.vmem [resolvable:$true] %s26
      %32 = dma.hbm_to_vmem [thread:$0]  %s1, 2048, %s27, [#allocation6], 128, 128, 8
    $region9: #{tpu_custom_call.1} parent=1 // pred_fallthru
      _
    // Predicated region
    $region10: #{tpu_custom_call.1} parent=1 // pred_check
      _
    $region11: #{tpu_custom_call.1} parent=1 // pred_check_branch
      %34 = sbr.rel (0) target = $region13
    $region12: #{tpu_custom_call.1} parent=1 // pred_region
      _
    $region13: #{tpu_custom_call.1} parent=1 // pred_fallthru
      _
    // Predicated region
    $region14: #{tpu_custom_call.1} parent=1 // pred_check
      _
    $region15: #{tpu_custom_call.1} parent=1 // pred_check_branch
      %36 = sbr.rel (0) target = $region17
    $region16: #{tpu_custom_call.1} parent=1 // pred_region
      %37 = dma.done [#allocation3], 128
    $region17: #{tpu_custom_call.1} parent=1 // pred_fallthru
      _
    // Predicated region
    $region18: #{tpu_custom_call.1} parent=1 // pred_check
      _
    $region19: #{tpu_custom_call.1} parent=1 // pred_check_branch
      %39 = sbr.rel (0) target = $region21
    $region20: #{tpu_custom_call.1} parent=1 // pred_region
      %40 = dma.done [#allocation6], 2048
    $region21: #{tpu_custom_call.1} parent=1 // pred_fallthru
      _
    %v41 = vld [vmem:[#allocation2] sm:$0xff]
    %v42 = vld [vmem:[#allocation5] sm:$0xff]
    %v43 = vld [vmem:[#allocation5 + $0x8] sm:$0xff]
    %v44 = vld [vmem:[#allocation5 + $0x10] sm:$0xff]
    %v45 = vld [vmem:[#allocation5 + $0x18] sm:$0xff]
    %v46 = vld [vmem:[#allocation5 + $0x20] sm:$0xff]
    %v47 = vld [vmem:[#allocation5 + $0x28] sm:$0xff]
    %v48 = vld [vmem:[#allocation5 + $0x30] sm:$0xff]
    %v49 = vld [vmem:[#allocation5 + $0x38] sm:$0xff]
    %v50 = vld [vmem:[#allocation5 + $0x40] sm:$0xff]
    %v51 = vld [vmem:[#allocation5 + $0x48] sm:$0xff]
    %v52 = vld [vmem:[#allocation5 + $0x50] sm:$0xff]
    %v53 = vld [vmem:[#allocation5 + $0x58] sm:$0xff]
    %v54 = vld [vmem:[#allocation5 + $0x60] sm:$0xff]
    %v55 = vld [vmem:[#allocation5 + $0x68] sm:$0xff]
    %v56 = vld [vmem:[#allocation5 + $0x70] sm:$0xff]
    %v57 = vld [vmem:[#allocation5 + $0x78] sm:$0xff]
    %58 = vmatprep.subr.mxu0 0.0
    %59 = vmatpush1.msra.mxu0 %v57
    %60 = vmatprep.subr.mxu0 0.0
    %61 = vmatpush1.msra.mxu0 %v56
    %62 = vmatprep.subr.mxu0 0.0
    %63 = vmatpush1.msra.mxu0 %v55
    %64 = vmatprep.subr.mxu0 0.0
    %65 = vmatpush1.msra.mxu0 %v54
    %66 = vmatprep.subr.mxu0 0.0
    %67 = vmatpush1.msra.mxu0 %v53
    %68 = vmatprep.subr.mxu0 0.0
    %69 = vmatpush1.msra.mxu0 %v52
    %70 = vmatprep.subr.mxu0 0.0
    %71 = vmatpush1.msra.mxu0 %v51
    %72 = vmatprep.subr.mxu0 0.0
    %73 = vmatpush1.msra.mxu0 %v50
    %74 = vmatprep.subr.mxu0 0.0
    %75 = vmatpush1.msra.mxu0 %v49
    %76 = vmatprep.subr.mxu0 0.0
    %77 = vmatpush1.msra.mxu0 %v48
    %78 = vmatprep.subr.mxu0 0.0
    %79 = vmatpush1.msra.mxu0 %v47
    %80 = vmatprep.subr.mxu0 0.0
    %81 = vmatpush1.msra.mxu0 %v46
    %82 = vmatprep.subr.mxu0 0.0
    %83 = vmatpush1.msra.mxu0 %v45
    %84 = vmatprep.subr.mxu0 0.0
    %85 = vmatpush1.msra.mxu0 %v44
    %86 = vmatprep.subr.mxu0 0.0
    %87 = vmatpush1.msra.mxu0 %v43
    %88 = vmatprep.subr.mxu0 0.0
    %89 = vmatpush1.msra.mxu0 %v42
    %90 = vmatprep.subr.mxu0 0.0
    %91 = vmatpush2.msra.mxu0 0.0
    %92 = vmatprep.subr.mxu0 0.0
    %93 = vmatpush2.msra.mxu0 0.0
    %94 = vmatprep.subr.mxu0 0.0
    %95 = vmatpush2.msra.mxu0 0.0
    %96 = vmatprep.subr.mxu0 0.0
    %97 = vmatpush2.msra.mxu0 0.0
    %98 = vmatprep.subr.mxu0 0.0
    %99 = vmatpush2.msra.mxu0 0.0
    %100 = vmatprep.subr.mxu0 0.0
    %101 = vmatpush2.msra.mxu0 0.0
    %102 = vmatprep.subr.mxu0 0.0
    %103 = vmatpush2.msra.mxu0 0.0
    %104 = vmatprep.subr.mxu0 0.0
    %105 = vmatpush2.msra.mxu0 0.0
    %106 = vmatprep.subr.mxu0 0.0
    %107 = vmatpush2.msra.mxu0 0.0
    %108 = vmatprep.subr.mxu0 0.0
    %109 = vmatpush2.msra.mxu0 0.0
    %110 = vmatprep.subr.mxu0 0.0
    %111 = vmatpush2.msra.mxu0 0.0
    %112 = vmatprep.subr.mxu0 0.0
    %113 = vmatpush2.msra.mxu0 0.0
    %114 = vmatprep.subr.mxu0 0.0
    %115 = vmatpush2.msra.mxu0 0.0
    %116 = vmatprep.subr.mxu0 0.0
    %117 = vmatpush2.msra.mxu0 0.0
    %118 = vmatprep.subr.mxu0 0.0
    %119 = vmatpush2.msra.mxu0 0.0
    %120 = vmatprep.subr.mxu0 0.0
    %121 = vmatpush2.msra.mxu0 0.0
    %122 = vmatprep.mubr.f32.mxu0 0.0
    %123 = vmatmul.mubr.f32.gmra.mxu0 %v41
    %v124 = vpop.f32.mrf.mxu0
    %v125 = vadd.f32 0.0, %v124
    %v126 = vpop.f32.mrf.mxu0
    %127 = vdwg.mxu0
    %p128 = scmp.eq.s32.totalorder 0, 0
    // Predicated region
    $region22: #{tpu_custom_call.1} parent=1 // pred_check
      %p129 = pneg %p128
    $region23: #{tpu_custom_call.1} parent=1 // pred_check_branch
      %131 = sbr.rel (%p129) target = $region25
    $region24: #{tpu_custom_call.1} parent=1 // pred_region
      %132 = vst [vmem:[#allocation7] sm:$0xff] %v125
    $region25: #{tpu_custom_call.1} parent=1 // pred_fallthru
      _
    %p133 = scmp.gt.s32.totalorder 0, 0
    // Predicated region
    $region26: #{tpu_custom_call.1} parent=1 // pred_check
      %p134 = pneg %p133
    $region27: #{tpu_custom_call.1} parent=1 // pred_check_branch
      %136 = sbr.rel (%p134) target = $region29
    $region28: #{tpu_custom_call.1} parent=1 // pred_region
      %v137 = vld [vmem:[#allocation7] sm:$0xff]
      %v138 = vadd.f32 %v137, %v125
      %139 = vst [vmem:[#allocation7] sm:$0xff] %v138
    $region29: #{tpu_custom_call.1} parent=1 // pred_fallthru
      _
    // Predicated region
    $region30: #{tpu_custom_call.1} parent=1 // pred_check
      %p140 = pneg %p128
    $region31: #{tpu_custom_call.1} parent=1 // pred_check_branch
      %142 = sbr.rel (%p140) target = $region33
    $region32: #{tpu_custom_call.1} parent=1 // pred_region
      %v143 = vld [vmem:[#allocation7] sm:$0xff]
      %v144 = vld [vmem:[%s2] sm:$0x1]
      %v146 = vlaneseq
      %v147 = vshrl.u32 %v146, 7
      %v148 = vsub.s32 0, %v147
      %v149 = vrot.slane %v144, %v148
      %v151 = vadd.f32 %v143, %v149
      %v152 = vmax.f32 %v151, 0.0
      %153 = vst [vmem:[#allocation7] sm:$0xff] %v152
    $region33: #{tpu_custom_call.1} parent=1 // pred_fallthru
      _
    // Predicated region
    $region34: #{tpu_custom_call.1} parent=1 // pred_check
      _
    $region35: #{tpu_custom_call.1} parent=1 // pred_check_branch
      %155 = sbr.rel (0) target = $region37
    $region36: #{tpu_custom_call.1} parent=1 // pred_region
      %s157 = ssub.s32 128, 128
      %158 = vsyncadd [#allocation4], %s157
      %s160 = sshll.u32 [#allocation7], 4
      %s161 = int_to_ptr.vmem [resolvable:$true] %s160
      %163 = dma.vmem_to_hbm [thread:$0]  %s161, 128, %s3, [#allocation4]
    $region37: #{tpu_custom_call.1} parent=1 // pred_fallthru
      _
    // Predicated region
    $region38: #{tpu_custom_call.1} parent=1 // pred_check
      _
    $region39: #{tpu_custom_call.1} parent=1 // pred_check_branch
      %165 = sbr.rel (0) target = $region41
    $region40: #{tpu_custom_call.1} parent=1 // pred_region
      %166 = dma.done [#allocation4], 128
    $region41: #{tpu_custom_call.1} parent=1 // pred_fallthru
      _
    %167 = vsyncpa [#allocation3], 1
    %168 = vsyncpa [#allocation6], 1
    %169 = vsyncpa [#allocation4], 1

</llo_original>
